<compile_context>
chip_gen: v7x
topology: tpu7x:2x2x1
jax: 0.10.0
libtpu: 0.0.40
codegen_flags: <defaults>
</compile_context>

<pallas_src>
import math
import functools

import jax
import jax.numpy as jnp
from jax import lax
from jax.experimental import pallas as pl
from jax.experimental.pallas import tpu as pltpu


# --------------------------------------------------------------------------- #
# Phase 1: project K and V once, head-major, to HBM.                           #
# Grid: (batch b, kv-tile s, head h); h innermost so the raw (block_kv, D)     #
# K/V input blocks are reused across heads without re-DMA; weights resident.   #
# --------------------------------------------------------------------------- #
def _kv_proj_kernel(k_ref, v_ref, wk_ref, bk_ref, wv_ref, bv_ref,
                    kp_ref, vp_ref):
    h = pl.program_id(2)
    kp_ref[...] = (jnp.dot(k_ref[...], wk_ref[h],
                           preferred_element_type=jnp.float32)
                   + bk_ref[h]).astype(kp_ref.dtype)
    vp_ref[...] = (jnp.dot(v_ref[...], wv_ref[h],
                           preferred_element_type=jnp.float32)
                   + bv_ref[h]).astype(vp_ref.dtype)


# --------------------------------------------------------------------------- #
# Phase 2: per-head Q projection + exact softmax attention + fused concat/Wo.  #
# Grid: (batch b, query-tile j, head h); h innermost, the f32 accumulator is   #
# resident across heads and holds sum_h ctx_h @ Wo_h for the (b, j) out block. #
# --------------------------------------------------------------------------- #
def _attn_kernel(q_ref, kp_ref, vp_ref, wq_ref, bq_ref, wo_ref, bo_ref,
                 *refs, num_heads, scale, return_attn, exp_dtype):
    if return_attn:
        out_ref, attn_ref, acc_ref = refs
    else:
        out_ref, acc_ref = refs
        attn_ref = None

    h = pl.program_id(2)
    cdt = wq_ref.dtype  # MXU operand dtype (f32 or bf16); accumulation stays f32.

    @pl.when(h == 0)
    def _():
        acc_ref[...] = jnp.zeros_like(acc_ref)

    # Per-head Q projection for this query tile; fold 1/sqrt(d_k) into Q once
    # (O(block_q * d_k) instead of an O(block_q * S) multiply on the scores).
    qh = jnp.dot(q_ref[...], wq_ref[h],
                 preferred_element_type=jnp.float32) + bq_ref[h]
    qh = (qh * scale).astype(cdt)                        # (block_q, d_k)

    kh = kp_ref[...]                                     # (S, d_k) projected K
    vh = vp_ref[...]                                     # (S, d_k) projected V

    # scores = Qh @ Kh^T without an explicit transpose: contract last dims.
    s = lax.dot_general(qh, kh, (((1,), (1,)), ((), ())),
                        preferred_element_type=jnp.float32)   # (block_q, S)

    # Numerically stable softmax; denominator reciprocal on the EUP.
    s = s - jnp.max(s, axis=-1, keepdims=True)
    if exp_dtype == jnp.dtype(jnp.float32):
        e = jnp.exp(s)
        p = e * pl.reciprocal(jnp.sum(e, axis=-1, keepdims=True), approx=True)
    else:
        # bf16 exponent: ~2x EUP throughput on v6e/v7x; running sum stays f32.
        e = jnp.exp(s.astype(exp_dtype))
        denom = jnp.sum(e.astype(jnp.float32), axis=-1, keepdims=True)
        p = e * pl.reciprocal(denom, approx=True).astype(exp_dtype)

    if return_attn:
        attn_ref[...] = p.astype(attn_ref.dtype)

    # Per-head context, then fused "concat + output projection":
    # acc += ctx_h @ Wo[h*d_k:(h+1)*d_k, :], accumulated over the head grid axis.
    ctx = jnp.dot(p.astype(cdt), vh,
                  preferred_element_type=jnp.float32)    # (block_q, d_k)
    acc_ref[...] += jnp.dot(ctx.astype(cdt), wo_ref[h],
                            preferred_element_type=jnp.float32)

    @pl.when(h == num_heads - 1)
    def _():
        out_ref[...] = (acc_ref[...] + bo_ref[...]).astype(out_ref.dtype)


def _vmem_limit_bytes(estimated_bytes):
    """Scoped-VMEM limit: ~2x the estimated footprint + slack, capped by chip VMEM."""
    cap = 64 << 20  # safe on every generation (v7x physical VMEM = 64 MiB / TC)
    try:
        info = pltpu.get_tpu_info()
        vc = getattr(info, "vmem_capacity_bytes", None)
        if vc:
            cap = int(0.85 * vc)
    except Exception:
        pass
    want = int(2 * estimated_bytes + (8 << 20))
    return max(32 << 20, min(want, cap))


def multi_head_attention(q, k, v, params, *, num_heads, block_q=None,
                         block_kv=None, return_attn=True, compute_dtype=None,
                         out_dtype=None, attn_dtype=None, exp_dtype=None):
    """q, k, v: (B, S, D). params: (wq, bq, wk, bk, wv, bv, wo, bo) with weights
    stored [in, out] (transpose of torch Linear.weight) and biases (1, D).

    Returns (output (B,S,D), attn (B,H,S,S)) or just output if return_attn=False.
    compute_dtype=jnp.bfloat16 feeds the MXU bf16 operands (f32 accumulation);
    attn_dtype / out_dtype select the HBM stream dtypes; exp_dtype=jnp.bfloat16
    enables the bf16 EUP exponent (v6e/v7x only — keep f32 on v5e)."""
    B, S, D = q.shape
    assert k.shape == (B, S, D) and v.shape == (B, S, D)
    assert D % num_heads == 0, "d_model must be divisible by num_heads"
    d_k = D // num_heads

    in_dtype = q.dtype
    out_dtype = in_dtype if out_dtype is None else out_dtype
    attn_dtype = jnp.float32 if attn_dtype is None else attn_dtype
    exp_dtype = jnp.dtype(jnp.float32 if exp_dtype is None else exp_dtype)

    wq, bq, wk, bk, wv, bv, wo, bo = params
    if compute_dtype is not None:
        cast = lambda x: x.astype(compute_dtype)
        q, k, v = cast(q), cast(k), cast(v)
        wq, bq, wk, bk, wv, bv, wo, bo = map(cast, (wq, bq, wk, bk, wv, bv, wo, bo))
    cdt = wq.dtype

    def pick_block(requested):
        if requested is not None:
            assert S % requested == 0, "seq length must be divisible by the block"
            return requested
        for cand in (256, 128, 64, 32, 16, 8):   # 256 feeds v6e/v7x MXU; v5e: pass 128
            if S % cand == 0:
                return min(cand, S)
        return S
    block_q = pick_block(block_q)
    block_kv = pick_block(block_kv)
    nq = S // block_q
    nkv = S // block_kv

    # Head-major weight layouts (built once at wrapper level, cheap XLA ops) so
    # every per-head slice has full trailing dims for any d_k.
    def head_major(w):                                         # (D, D) -> (H, D, d_k)
        return w.reshape(D, num_heads, d_k).transpose(1, 0, 2)
    wq_h, wk_h, wv_h = head_major(wq), head_major(wk), head_major(wv)
    bq_h = bq.reshape(num_heads, 1, d_k)
    bk_h = bk.reshape(num_heads, 1, d_k)
    bv_h = bv.reshape(num_heads, 1, d_k)
    wo_h = wo.reshape(num_heads, d_k, D)
    bo2 = bo.reshape(1, D)

    sq = pl.Squeezed()
    isz = lambda dt: jnp.dtype(dt).itemsize
    csz = isz(cdt)

    # ------------------------- phase 1: K/V projection ------------------------ #
    def resident(shape):       # full array in VMEM, DMA'd exactly once
        return pl.BlockSpec(shape, lambda b, s, h: (0,) * len(shape))

    kv_in_spec = pl.BlockSpec((sq, block_kv, D), lambda b, s, h: (b, s, 0))
    kvp_out_spec = pl.BlockSpec((sq, sq, block_kv, d_k), lambda b, s, h: (b, h, s, 0))

    proj_est = (4 * block_kv * D * csz                 # k + v blocks (double-buffered)
                + 2 * (D * D + D) * csz                # resident wk/bk/wv/bv
                + 4 * block_kv * d_k * csz             # kp + vp blocks (double-buffered)
                + 4 * block_kv * max(D, 128) * 4)      # temporaries headroom

    kp, vp = pl.pallas_call(
        _kv_proj_kernel,
        out_shape=(jax.ShapeDtypeStruct((B, num_heads, S, d_k), cdt),
                   jax.ShapeDtypeStruct((B, num_heads, S, d_k), cdt)),
        grid=(B, nkv, num_heads),
        in_specs=[kv_in_spec, kv_in_spec,
                  resident((num_heads, D, d_k)), resident((num_heads, 1, d_k)),
                  resident((num_heads, D, d_k)), resident((num_heads, 1, d_k))],
        out_specs=(kvp_out_spec, kvp_out_spec),
        compiler_params=pltpu.CompilerParams(
            dimension_semantics=("parallel", "parallel", "arbitrary"),
            vmem_limit_bytes=_vmem_limit_bytes(proj_est)),
        cost_estimate=pl.CostEstimate(
            flops=4 * B * S * D * D,
            transcendentals=0,
            bytes_accessed=2 * B * S * D * isz(k.dtype)
                           + 2 * (D * D + D) * csz
                           + 2 * B * S * D * csz),
    )(k, v, wk_h, bk_h, wv_h, bv_h)

    # --------------------------- phase 2: attention --------------------------- #
    def resident2(shape):
        return pl.BlockSpec(shape, lambda b, j, h: (0,) * len(shape))

    q_spec = pl.BlockSpec((sq, block_q, D), lambda b, j, h: (b, j, 0))
    kvp_in_spec = pl.BlockSpec((sq, sq, S, d_k), lambda b, j, h: (b, h, 0, 0))
    out_spec = pl.BlockSpec((sq, block_q, D), lambda b, j, h: (b, j, 0))

    out_shapes = [jax.ShapeDtypeStruct((B, S, D), out_dtype)]
    out_specs = [out_spec]
    if return_attn:
        out_shapes.append(jax.ShapeDtypeStruct((B, num_heads, S, S), attn_dtype))
        out_specs.append(pl.BlockSpec((sq, sq, block_q, S),
                                      lambda b, j, h: (b, h, j, 0)))

    attn_est = (2 * block_q * D * isz(q.dtype)              # q block (double-buffered)
                + 4 * S * d_k * csz                          # kp + vp blocks
                + (2 * D * D + 2 * D) * csz                  # resident wq/bq/wo/bo
                + 2 * block_q * D * isz(out_dtype)           # out block
                + (2 * block_q * S * isz(attn_dtype) if return_attn else 0)
                + block_q * D * 4                            # f32 accumulator scratch
                + 6 * block_q * max(S, 128) * 4)             # scores/softmax temporaries

    kernel = functools.partial(
        _attn_kernel, num_heads=num_heads, scale=1.0 / math.sqrt(d_k),
        return_attn=return_attn, exp_dtype=exp_dtype)

    flops = 4 * B * S * D * D + 4 * B * num_heads * S * S * d_k
    bytes_accessed = (B * S * D * isz(q.dtype)
                      + 2 * nq * B * num_heads * S * d_k * csz   # K/V re-read per q tile
                      + (2 * D * D + 2 * D) * csz
                      + B * S * D * isz(out_dtype)
                      + (B * num_heads * S * S * isz(attn_dtype) if return_attn else 0))

    results = pl.pallas_call(
        kernel,
        out_shape=tuple(out_shapes),
        grid=(B, nq, num_heads),
        in_specs=[q_spec, kvp_in_spec, kvp_in_spec,
                  resident2((num_heads, D, d_k)), resident2((num_heads, 1, d_k)),
                  resident2((num_heads, d_k, D)), resident2((1, D))],
        out_specs=tuple(out_specs),
        scratch_shapes=[pltpu.VMEM((block_q, D), jnp.float32)],
        # Batch and query-tile axes are independent (megacore-shardable); the head
        # axis is arbitrary because the output block / accumulator is carried
        # across it.
        compiler_params=pltpu.CompilerParams(
            dimension_semantics=("parallel", "parallel", "arbitrary"),
            vmem_limit_bytes=_vmem_limit_bytes(attn_est)),
        cost_estimate=pl.CostEstimate(
            flops=flops,
            transcendentals=B * num_heads * S * S,
            bytes_accessed=bytes_accessed),
    )(q, kp, vp, wq_h, bq_h, wo_h, bo2)

    if return_attn:
        out, attn = results
        return out, attn
    return results[0] if isinstance(results, (tuple, list)) else results


def _reference(q, k, v, params, *, num_heads):
    """Pure-JAX reference mirroring the PyTorch forward (mask=None, no dropout)."""
    B, S, D = q.shape
    d_k = D // num_heads
    wq, bq, wk, bk, wv, bv, wo, bo = params
    Q = q @ wq + bq
    K = k @ wk + bk
    V = v @ wv + bv
    Qh = Q.reshape(B, S, num_heads, d_k).transpose(0, 2, 1, 3)
    Kh = K.reshape(B, S, num_heads, d_k).transpose(0, 2, 1, 3)
    Vh = V.reshape(B, S, num_heads, d_k).transpose(0, 2, 1, 3)
    scores = jnp.einsum('bhqd,bhkd->bhqk', Qh, Kh) / math.sqrt(d_k)
    attn = jax.nn.softmax(scores, axis=-1)
    outh = jnp.einsum('bhqk,bhkd->bhqd', attn, Vh)
    concat = outh.transpose(0, 2, 1, 3).reshape(B, S, D)
    out = concat @ wo + bo
    return out, attn


if __name__ == "__main__":
    B, S, D, H = 2, 8, 32, 4   # batch, seq, d_model, num_heads

    key = jax.random.PRNGKey(0)
    keys = jax.random.split(key, 11)

    q = jax.random.normal(keys[0], (B, S, D), dtype=jnp.float32)
    k = jax.random.normal(keys[1], (B, S, D), dtype=jnp.float32)
    v = jax.random.normal(keys[2], (B, S, D), dtype=jnp.float32)

    # PyTorch nn.Linear weight is (out, in); we store the transpose (in, out).
    def init_linear(kw, kb):
        bound = 1.0 / math.sqrt(D)
        w = jax.random.uniform(kw, (D, D), jnp.float32, -bound, bound)
        b = jax.random.uniform(kb, (1, D), jnp.float32, -bound, bound)
        return w, b

    wq, bq = init_linear(keys[3], keys[4])
    wk, bk = init_linear(keys[5], keys[6])
    wv, bv = init_linear(keys[7], keys[8])
    wo, bo = init_linear(keys[9], keys[10])
    params = (wq, bq, wk, bk, wv, bv, wo, bo)

    ref_out, ref_attn = _reference(q, k, v, params, num_heads=H)

    # 1) Full module semantics: (output, attention_weights), f32 compute.
    out, attn = multi_head_attention(q, k, v, params, num_heads=H)
    out = jax.block_until_ready(out)
    attn = jax.block_until_ready(attn)
    assert out.shape == (B, S, D) and attn.shape == (B, H, S, S)
    assert jnp.allclose(out, ref_out, atol=2e-3, rtol=2e-3)
    assert jnp.allclose(attn, ref_attn, atol=2e-3, rtol=2e-3)

    # 2) Attention-weights output skipped (drops the dominant (B,H,S,S) HBM stream).
    out_only = multi_head_attention(q, k, v, params, num_heads=H, return_attn=False)
    out_only = jax.block_until_ready(out_only)
    assert jnp.allclose(out_only, ref_out, atol=2e-3, rtol=2e-3)

    # 3) bf16 MXU operands + bf16 attn stream + bf16 softmax exponent
    #    (v6e/v7x fast path; keep exp_dtype=f32 on v5e).  f32 accumulation.
    out_bf, attn_bf = multi_head_attention(
        q, k, v, params, num_heads=H, compute_dtype=jnp.bfloat16,
        attn_dtype=jnp.bfloat16, exp_dtype=jnp.bfloat16)
    out_bf = jax.block_until_ready(out_bf)
    attn_bf = jax.block_until_ready(attn_bf)
    assert jnp.allclose(out_bf, ref_out, atol=5e-2, rtol=5e-2)
    assert jnp.allclose(attn_bf.astype(jnp.float32), ref_attn, atol=5e-2, rtol=5e-2)

    print("KERNEL_OK")
</pallas_src>

<mosaic_0001>
module attributes {stable_mosaic.version = 11 : i64} {
  func.func @_kv_proj_kernel(%arg0: i32, %arg1: i32, %arg2: i32, %arg3: memref<1x8x32xf32, #tpu.memory_space<vmem>>, %arg4: memref<1x8x32xf32, #tpu.memory_space<vmem>>, %arg5: memref<4x32x8xf32, #tpu.memory_space<vmem>>, %arg6: memref<4x1x8xf32, #tpu.memory_space<vmem>>, %arg7: memref<4x32x8xf32, #tpu.memory_space<vmem>>, %arg8: memref<4x1x8xf32, #tpu.memory_space<vmem>>, %arg9: memref<1x1x8x8xf32, #tpu.memory_space<vmem>>, %arg10: memref<1x1x8x8xf32, #tpu.memory_space<vmem>>) attributes {dimension_semantics = [#tpu.dimension_semantics<parallel>, #tpu.dimension_semantics<parallel>, #tpu.dimension_semantics<arbitrary>], iteration_bounds = array<i64: 2, 1, 4>, scalar_prefetch = 0 : i64, scratch_operands = 0 : i64, tpu.core_type = #tpu.core_type<tc>, window_params = [{transform_indices = @transform_0, window_bounds = array<i64: 1, 8, 32>}, {transform_indices = @transform_1, window_bounds = array<i64: 1, 8, 32>}, {pipeline_mode = #tpu.pipeline_mode<synchronous>, transform_indices = @transform_2, window_bounds = array<i64: 4, 32, 8>}, {pipeline_mode = #tpu.pipeline_mode<synchronous>, transform_indices = @transform_3, window_bounds = array<i64: 4, 1, 8>}, {pipeline_mode = #tpu.pipeline_mode<synchronous>, transform_indices = @transform_4, window_bounds = array<i64: 4, 32, 8>}, {pipeline_mode = #tpu.pipeline_mode<synchronous>, transform_indices = @transform_5, window_bounds = array<i64: 4, 1, 8>}, {transform_indices = @transform_6, window_bounds = array<i64: 1, 1, 8, 8>}, {transform_indices = @transform_7, window_bounds = array<i64: 1, 1, 8, 8>}]} {
    %c0 = arith.constant 0 : index
    %c0_0 = arith.constant 0 : index
    %c0_1 = arith.constant 0 : index
    %0 = vector.load %arg3[%c0, %c0_0, %c0_1] : memref<1x8x32xf32, #tpu.memory_space<vmem>>, vector<1x8x32xf32>
    %1 = vector.shape_cast %0 : vector<1x8x32xf32> to vector<8x32xf32>
    %2 = arith.index_cast %arg2 : i32 to index
    %c0_2 = arith.constant 0 : index
    %c0_3 = arith.constant 0 : index
    %3 = vector.load %arg5[%2, %c0_2, %c0_3] : memref<4x32x8xf32, #tpu.memory_space<vmem>>, vector<1x32x8xf32>
    %4 = vector.shape_cast %3 : vector<1x32x8xf32> to vector<32x8xf32>
    %cst = arith.constant dense<0.000000e+00> : vector<8x8xf32>
    %5 = tpu.matmul %1, %4, %cst {dimension_numbers = #tpu.dot_dimension_numbers<[1], [0], [0], [1], [0, 0, 1, 1], [], []>} : vector<8x32xf32>, vector<32x8xf32>, vector<8x8xf32> -> vector<8x8xf32>
    %6 = arith.index_cast %arg2 : i32 to index
    %c0_4 = arith.constant 0 : index
    %c0_5 = arith.constant 0 : index
    %7 = vector.load %arg6[%6, %c0_4, %c0_5] : memref<4x1x8xf32, #tpu.memory_space<vmem>>, vector<1x1x8xf32>
    %8 = vector.shape_cast %7 : vector<1x1x8xf32> to vector<1x8xf32>
    %9 = vector.broadcast %8 : vector<1x8xf32> to vector<8x8xf32>
    %10 = arith.addf %5, %9 : vector<8x8xf32>
    %c0_6 = arith.constant 0 : index
    %c0_7 = arith.constant 0 : index
    %c0_8 = arith.constant 0 : index
    %c0_9 = arith.constant 0 : index
    %11 = vector.load %arg9[%c0_6, %c0_7, %c0_8, %c0_9] : memref<1x1x8x8xf32, #tpu.memory_space<vmem>>, vector<1x1x8x8xf32>
    %12 = vector.shape_cast %11 : vector<1x1x8x8xf32> to vector<8x8xf32>
    %13 = vector.shape_cast %10 : vector<8x8xf32> to vector<1x1x8x8xf32>
    tpu.vector_store %arg9[%c0_6, %c0_7, %c0_8, %c0_9], %13 {strides = array<i32>} : memref<1x1x8x8xf32, #tpu.memory_space<vmem>>, vector<1x1x8x8xf32>,
    %c0_10 = arith.constant 0 : index
    %c0_11 = arith.constant 0 : index
    %c0_12 = arith.constant 0 : index
    %14 = vector.load %arg4[%c0_10, %c0_11, %c0_12] : memref<1x8x32xf32, #tpu.memory_space<vmem>>, vector<1x8x32xf32>
    %15 = vector.shape_cast %14 : vector<1x8x32xf32> to vector<8x32xf32>
    %16 = arith.index_cast %arg2 : i32 to index
    %c0_13 = arith.constant 0 : index
    %c0_14 = arith.constant 0 : index
    %17 = vector.load %arg7[%16, %c0_13, %c0_14] : memref<4x32x8xf32, #tpu.memory_space<vmem>>, vector<1x32x8xf32>
    %18 = vector.shape_cast %17 : vector<1x32x8xf32> to vector<32x8xf32>
    %cst_15 = arith.constant dense<0.000000e+00> : vector<8x8xf32>
    %19 = tpu.matmul %15, %18, %cst_15 {dimension_numbers = #tpu.dot_dimension_numbers<[1], [0], [0], [1], [0, 0, 1, 1], [], []>} : vector<8x32xf32>, vector<32x8xf32>, vector<8x8xf32> -> vector<8x8xf32>
    %20 = arith.index_cast %arg2 : i32 to index
    %c0_16 = arith.constant 0 : index
    %c0_17 = arith.constant 0 : index
    %21 = vector.load %arg8[%20, %c0_16, %c0_17] : memref<4x1x8xf32, #tpu.memory_space<vmem>>, vector<1x1x8xf32>
    %22 = vector.shape_cast %21 : vector<1x1x8xf32> to vector<1x8xf32>
    %23 = vector.broadcast %22 : vector<1x8xf32> to vector<8x8xf32>
    %24 = arith.addf %19, %23 : vector<8x8xf32>
    %c0_18 = arith.constant 0 : index
    %c0_19 = arith.constant 0 : index
    %c0_20 = arith.constant 0 : index
    %c0_21 = arith.constant 0 : index
    %25 = vector.load %arg10[%c0_18, %c0_19, %c0_20, %c0_21] : memref<1x1x8x8xf32, #tpu.memory_space<vmem>>, vector<1x1x8x8xf32>
    %26 = vector.shape_cast %25 : vector<1x1x8x8xf32> to vector<8x8xf32>
    %27 = vector.shape_cast %24 : vector<8x8xf32> to vector<1x1x8x8xf32>
    tpu.vector_store %arg10[%c0_18, %c0_19, %c0_20, %c0_21], %27 {strides = array<i32>} : memref<1x1x8x8xf32, #tpu.memory_space<vmem>>, vector<1x1x8x8xf32>,
    return
  }
  func.func @transform_0(%arg0: i32, %arg1: i32, %arg2: i32) -> (i32, i32, i32) {
    %c0_i32 = arith.constant 0 : i32
    %c0_i32_0 = arith.constant 0 : i32
    return %arg0, %arg1, %c0_i32 : i32, i32, i32
  }
  func.func @transform_1(%arg0: i32, %arg1: i32, %arg2: i32) -> (i32, i32, i32) {
    %c0_i32 = arith.constant 0 : i32
    %c0_i32_0 = arith.constant 0 : i32
    return %arg0, %arg1, %c0_i32 : i32, i32, i32
  }
  func.func @transform_2(%arg0: i32, %arg1: i32, %arg2: i32) -> (i32, i32, i32) {
    %c0_i32 = arith.constant 0 : i32
    %c0_i32_0 = arith.constant 0 : i32
    %c0_i32_1 = arith.constant 0 : i32
    %c0_i32_2 = arith.constant 0 : i32
    return %c0_i32, %c0_i32_0, %c0_i32_1 : i32, i32, i32
  }
  func.func @transform_3(%arg0: i32, %arg1: i32, %arg2: i32) -> (i32, i32, i32) {
    %c0_i32 = arith.constant 0 : i32
    %c0_i32_0 = arith.constant 0 : i32
    %c0_i32_1 = arith.constant 0 : i32
    %c0_i32_2 = arith.constant 0 : i32
    return %c0_i32, %c0_i32_0, %c0_i32_1 : i32, i32, i32
  }
  func.func @transform_4(%arg0: i32, %arg1: i32, %arg2: i32) -> (i32, i32, i32) {
    %c0_i32 = arith.constant 0 : i32
    %c0_i32_0 = arith.constant 0 : i32
    %c0_i32_1 = arith.constant 0 : i32
    %c0_i32_2 = arith.constant 0 : i32
    return %c0_i32, %c0_i32_0, %c0_i32_1 : i32, i32, i32
  }
  func.func @transform_5(%arg0: i32, %arg1: i32, %arg2: i32) -> (i32, i32, i32) {
    %c0_i32 = arith.constant 0 : i32
    %c0_i32_0 = arith.constant 0 : i32
    %c0_i32_1 = arith.constant 0 : i32
    %c0_i32_2 = arith.constant 0 : i32
    return %c0_i32, %c0_i32_0, %c0_i32_1 : i32, i32, i32
  }
  func.func @transform_6(%arg0: i32, %arg1: i32, %arg2: i32) -> (i32, i32, i32, i32) {
    %c0_i32 = arith.constant 0 : i32
    %c0_i32_0 = arith.constant 0 : i32
    return %arg0, %arg2, %arg1, %c0_i32 : i32, i32, i32, i32
  }
  func.func @transform_7(%arg0: i32, %arg1: i32, %arg2: i32) -> (i32, i32, i32, i32) {
    %c0_i32 = arith.constant 0 : i32
    %c0_i32_0 = arith.constant 0 : i32
    return %arg0, %arg2, %arg1, %c0_i32 : i32, i32, i32, i32
  }
}

</mosaic_0001>

<llo_original>
// kernel: tpu_custom_call.1
$region0: #{tpu_custom_call.1}
  #allocation0 [shape = 'u32[]', space=smem, size = 0x4, offset = 0x4, fixed_abs, tag = 'smem constant byte address 0x4 - core index']
  #allocation1 [shape = 'u32[144,128]{1,0:T(1,128)}', space=vmem, size = 0x12000, scoped, tag = 'internal scratch']
  %s0 = inlined_call_operand.vmem [shape: f32[2,8,32], index: 0, kind: input, shape index: {}]
  %s1 = inlined_call_operand.vmem [shape: f32[2,8,32], index: 1, kind: input, shape index: {}]
  %s2 = inlined_call_operand.vmem [shape: f32[4,32,8], index: 2, kind: input, shape index: {}]
  %s3 = inlined_call_operand.vmem [shape: f32[4,1,8], index: 3, kind: input, shape index: {}]
  %s4 = inlined_call_operand.vmem [shape: f32[4,32,8], index: 4, kind: input, shape index: {}]
  %s5 = inlined_call_operand.vmem [shape: f32[4,1,8], index: 5, kind: input, shape index: {}]
  %s6 = inlined_call_operand.hbm [shape: f32[2,4,8,8], index: 6, kind: output, shape index: {0}]
  %s7 = inlined_call_operand.hbm [shape: f32[2,4,8,8], index: 7, kind: output, shape index: {1}]
  %8 = xla_tuple %s6, %s7
  %s9 = sld [smem:[#allocation0]]
  $region65: #{tpu_custom_call.1} parent=0
    _
  %s11 = ssub.s32 1, %s9
  %s12 = scalar_select 0, %s11, %s9
  $region1: #{tpu_custom_call.1} parent=0
    #allocation2 [shape = 'u8[8192]{0}', space=vmem, size = 0x2000, scoped, tag = 'output window, operand 0']
    #allocation3 [shape = 's32[2]{0}', space=sflag, size = 0x8, scoped, tag = 'scoped memory for tpu_custom_call.1']
    #allocation4 [shape = 'u8[8192]{0}', space=vmem, size = 0x2000, scoped, tag = 'output window, operand 1']
    #allocation5 [shape = 's32[2]{0}', space=sflag, size = 0x8, scoped, tag = 'scoped memory for tpu_custom_call.1']
    %13 = vsyncpa [#allocation3], 0
    %s14 = scalar_lea.sflag [#allocation3], 1
    %15 = vsyncpa %s14, 0
    %16 = vsyncpa [#allocation5], 0
    %s17 = scalar_lea.sflag [#allocation5], 1
    %18 = vsyncpa %s17, 0
    loop: start=0, step=1, limit=10
    $region2: #{tpu_custom_call.1} parent=1 // loop_pre_header
      _
    $region3: #{tpu_custom_call.1} parent=1 // loop_header
      %s20 = sphi 0, %s24
      %p21 = scmp.ge.s32.totalorder %s20, 10
      %s27 = sphi 0, %s46
      %s28 = sphi 0, %s42
      %s29 = sphi 0, %s38
      %s30 = sphi 0, %s27
      %s31 = sphi 0, %s28
      %s32 = sphi 0, %s29
      %s33 = sphi 0, %s30
      %s34 = sphi 0, %s31
      %s35 = sphi 0, %s32
      %s51 = sphi 0, %s53
      %s54 = sphi 0, %s51
      %s55 = sphi 0, %s54
      %s71 = sphi 0, %s55
      %s79 = sphi 0, %s81
      %s82 = sphi 0, %s79
      %s83 = sphi 0, %s82
      %s99 = sphi 0, %s83
      %s103 = sphi 0, %s103
      %s105 = sphi 0, %s103
      %s106 = sphi 0, %s105
      %s120 = sphi 0, %s106
      %s124 = sphi 0, %s124
      %s126 = sphi 0, %s124
      %s127 = sphi 0, %s126
      %s141 = sphi 0, %s127
      %s145 = sphi 0, %s145
      %s147 = sphi 0, %s145
      %s148 = sphi 0, %s147
      %s162 = sphi 0, %s148
      %s166 = sphi 0, %s166
      %s168 = sphi 0, %s166
      %s169 = sphi 0, %s168
      %s183 = sphi 0, %s169
      %s193 = sphi 0, %s195
      %s196 = sphi 0, %s193
      %s197 = sphi 0, %s196
      %s213 = sphi 0, %s197
      %s223 = sphi 0, %s225
      %s226 = sphi 0, %s223
      %s227 = sphi 0, %s226
      %s243 = sphi 0, %s227
    $region4: #{tpu_custom_call.1} parent=1 // loop_header_branch
      %23 = sbr.rel (%p21) target = $region8
    $region5: #{tpu_custom_call.1} parent=1 // loop_body
      %s25 = ssub.s32 %s20, 1
      %s26 = ssub.s32 %s20, 2
      %s36 = sadd.s32 1, %s29
      %p37 = scmp.ge.s32.totalorder %s36, 4
      %s38 = scalar_select %p37, 0, %s36
      %s39 = sadd.s32 1, %s28
      %s40 = scalar_select %p37, %s39, %s28
      %p41 = scmp.ge.s32.totalorder %s40, 1
      %s42 = scalar_select %p41, 0, %s40
      %s43 = sadd.s32 1, %s27
      %s44 = scalar_select %p41, %s43, %s27
      %p45 = scmp.ge.s32.totalorder %s44, 2
      %s46 = scalar_select %p45, 0, %s44
      %s47 = ssub.s32 %s27, %s46
      %s48 = ssub.s32 %s28, %s42
      %s49 = sor.u32 %s47, %s48
      %p50 = scmp.eq.s32.totalorder %s49, 0
      %s52 = sadd.s32 %s51, 1
      %s53 = scalar_select %p50, %s51, %s52
      %p56 = pneg %p50
      %p57 = scmp.eq.s32.totalorder %s20, 7
      %p58 = por %p56, %p57
      %p59 = scmp.ne.s32.totalorder %s51, %s54
      %p60 = scmp.eq.s32.totalorder %s20, 0
      %p61 = por %p59, %p60
      %p62 = scmp.ne.s32.totalorder %s51, %s54
      %p63 = scmp.eq.s32.totalorder %s25, 7
      %p64 = por %p62, %p63
      %p65 = scmp.ne.s32.totalorder %s54, %s55
      %p66 = scmp.eq.s32.totalorder %s25, 0
      %p67 = por %p65, %p66
      %p68 = scmp.ne.s32.totalorder %s54, %s55
      %p69 = scmp.eq.s32.totalorder %s26, 7
      %p70 = por %p68, %p69
      %p72 = scmp.ne.s32.totalorder %s55, %s71
      %p73 = scmp.eq.s32.totalorder %s26, 0
      %p74 = por %p72, %p73
      %s75 = ssub.s32 %s27, %s46
      %s76 = ssub.s32 %s28, %s42
      %s77 = sor.u32 %s75, %s76
      %p78 = scmp.eq.s32.totalorder %s77, 0
      %s80 = sadd.s32 %s79, 1
      %s81 = scalar_select %p78, %s79, %s80
      %p84 = pneg %p78
      %p85 = scmp.eq.s32.totalorder %s20, 7
      %p86 = por %p84, %p85
      %p87 = scmp.ne.s32.totalorder %s79, %s82
      %p88 = scmp.eq.s32.totalorder %s20, 0
      %p89 = por %p87, %p88
      %p90 = scmp.ne.s32.totalorder %s79, %s82
      %p91 = scmp.eq.s32.totalorder %s25, 7
      %p92 = por %p90, %p91
      %p93 = scmp.ne.s32.totalorder %s82, %s83
      %p94 = scmp.eq.s32.totalorder %s25, 0
      %p95 = por %p93, %p94
      %p96 = scmp.ne.s32.totalorder %s82, %s83
      %p97 = scmp.eq.s32.totalorder %s26, 7
      %p98 = por %p96, %p97
      %p100 = scmp.ne.s32.totalorder %s83, %s99
      %p101 = scmp.eq.s32.totalorder %s26, 0
      %p102 = por %p100, %p101
      %s104 = sadd.s32 %s103, 1
      %p107 = scmp.eq.s32.totalorder %s20, 7
      %p108 = scmp.ne.s32.totalorder %s103, %s105
      %p109 = scmp.eq.s32.totalorder %s20, 0
      %p110 = por %p108, %p109
      %p111 = scmp.ne.s32.totalorder %s103, %s105
      %p112 = scmp.eq.s32.totalorder %s25, 7
      %p113 = por %p111, %p112
      %p114 = scmp.ne.s32.totalorder %s105, %s106
      %p115 = scmp.eq.s32.totalorder %s25, 0
      %p116 = por %p114, %p115
      %p117 = scmp.ne.s32.totalorder %s105, %s106
      %p118 = scmp.eq.s32.totalorder %s26, 7
      %p119 = por %p117, %p118
      %p121 = scmp.ne.s32.totalorder %s106, %s120
      %p122 = scmp.eq.s32.totalorder %s26, 0
      %p123 = por %p121, %p122
      %s125 = sadd.s32 %s124, 1
      %p128 = scmp.eq.s32.totalorder %s20, 7
      %p129 = scmp.ne.s32.totalorder %s124, %s126
      %p130 = scmp.eq.s32.totalorder %s20, 0
      %p131 = por %p129, %p130
      %p132 = scmp.ne.s32.totalorder %s124, %s126
      %p133 = scmp.eq.s32.totalorder %s25, 7
      %p134 = por %p132, %p133
      %p135 = scmp.ne.s32.totalorder %s126, %s127
      %p136 = scmp.eq.s32.totalorder %s25, 0
      %p137 = por %p135, %p136
      %p138 = scmp.ne.s32.totalorder %s126, %s127
      %p139 = scmp.eq.s32.totalorder %s26, 7
      %p140 = por %p138, %p139
      %p142 = scmp.ne.s32.totalorder %s127, %s141
      %p143 = scmp.eq.s32.totalorder %s26, 0
      %p144 = por %p142, %p143
      %s146 = sadd.s32 %s145, 1
      %p149 = scmp.eq.s32.totalorder %s20, 7
      %p150 = scmp.ne.s32.totalorder %s145, %s147
      %p151 = scmp.eq.s32.totalorder %s20, 0
      %p152 = por %p150, %p151
      %p153 = scmp.ne.s32.totalorder %s145, %s147
      %p154 = scmp.eq.s32.totalorder %s25, 7
      %p155 = por %p153, %p154
      %p156 = scmp.ne.s32.totalorder %s147, %s148
      %p157 = scmp.eq.s32.totalorder %s25, 0
      %p158 = por %p156, %p157
      %p159 = scmp.ne.s32.totalorder %s147, %s148
      %p160 = scmp.eq.s32.totalorder %s26, 7
      %p161 = por %p159, %p160
      %p163 = scmp.ne.s32.totalorder %s148, %s162
      %p164 = scmp.eq.s32.totalorder %s26, 0
      %p165 = por %p163, %p164
      %s167 = sadd.s32 %s166, 1
      %p170 = scmp.eq.s32.totalorder %s20, 7
      %p171 = scmp.ne.s32.totalorder %s166, %s168
      %p172 = scmp.eq.s32.totalorder %s20, 0
      %p173 = por %p171, %p172
      %p174 = scmp.ne.s32.totalorder %s166, %s168
      %p175 = scmp.eq.s32.totalorder %s25, 7
      %p176 = por %p174, %p175
      %p177 = scmp.ne.s32.totalorder %s168, %s169
      %p178 = scmp.eq.s32.totalorder %s25, 0
      %p179 = por %p177, %p178
      %p180 = scmp.ne.s32.totalorder %s168, %s169
      %p181 = scmp.eq.s32.totalorder %s26, 7
      %p182 = por %p180, %p181
      %p184 = scmp.ne.s32.totalorder %s169, %s183
      %p185 = scmp.eq.s32.totalorder %s26, 0
      %p186 = por %p184, %p185
      %s187 = ssub.s32 %s27, %s46
      %s188 = ssub.s32 %s29, %s38
      %s189 = sor.u32 %s187, %s188
      %s190 = ssub.s32 %s28, %s42
      %s191 = sor.u32 %s189, %s190
      %p192 = scmp.eq.s32.totalorder %s191, 0
      %s194 = sadd.s32 %s193, 1
      %s195 = scalar_select %p192, %s193, %s194
      %p198 = pneg %p192
      %p199 = scmp.eq.s32.totalorder %s20, 7
      %p200 = por %p198, %p199
      %p201 = scmp.ne.s32.totalorder %s193, %s196
      %p202 = scmp.eq.s32.totalorder %s20, 0
      %p203 = por %p201, %p202
      %p204 = scmp.ne.s32.totalorder %s193, %s196
      %p205 = scmp.eq.s32.totalorder %s25, 7
      %p206 = por %p204, %p205
      %p207 = scmp.ne.s32.totalorder %s196, %s197
      %p208 = scmp.eq.s32.totalorder %s25, 0
      %p209 = por %p207, %p208
      %p210 = scmp.ne.s32.totalorder %s196, %s197
      %p211 = scmp.eq.s32.totalorder %s26, 7
      %p212 = por %p210, %p211
      %p214 = scmp.ne.s32.totalorder %s197, %s213
      %p215 = scmp.eq.s32.totalorder %s26, 0
      %p216 = por %p214, %p215
      %s217 = ssub.s32 %s27, %s46
      %s218 = ssub.s32 %s29, %s38
      %s219 = sor.u32 %s217, %s218
      %s220 = ssub.s32 %s28, %s42
      %s221 = sor.u32 %s219, %s220
      %p222 = scmp.eq.s32.totalorder %s221, 0
      %s224 = sadd.s32 %s223, 1
      %s225 = scalar_select %p222, %s223, %s224
      %p228 = pneg %p222
      %p229 = scmp.eq.s32.totalorder %s20, 7
      %p230 = por %p228, %p229
      %p231 = scmp.ne.s32.totalorder %s223, %s226
      %p232 = scmp.eq.s32.totalorder %s20, 0
      %p233 = por %p231, %p232
      %p234 = scmp.ne.s32.totalorder %s223, %s226
      %p235 = scmp.eq.s32.totalorder %s25, 7
      %p236 = por %p234, %p235
      %p237 = scmp.ne.s32.totalorder %s226, %s227
      %p238 = scmp.eq.s32.totalorder %s25, 0
      %p239 = por %p237, %p238
      %p240 = scmp.ne.s32.totalorder %s226, %s227
      %p241 = scmp.eq.s32.totalorder %s26, 7
      %p242 = por %p240, %p241
      %p244 = scmp.ne.s32.totalorder %s227, %s243
      %p245 = scmp.eq.s32.totalorder %s26, 0
      %p246 = por %p244, %p245
      %p247 = scmp.le.s32.totalorder 1, %s20
      %p248 = scmp.lt.s32.totalorder %s20, 9
      %p249 = pnand %p247, %p248
      %p250 = pneg %p249
      // Predicated region
      $region9: #{tpu_custom_call.1} parent=5 // pred_check
        _
      $region10: #{tpu_custom_call.1} parent=5 // pred_check_branch
        %252 = sbr.rel (%p249) target = $region12
      $region11: #{tpu_custom_call.1} parent=5 // pred_region
        %s253 = ssub.s32 %s20, 1
        // Predicated region
        $region13: #{tpu_custom_call.1} parent=11 // pred_check
          %p254 = pneg %p116
        $region14: #{tpu_custom_call.1} parent=11 // pred_check_branch
          %256 = sbr.rel (%p254) target = $region16
        $region15: #{tpu_custom_call.1} parent=11 // pred_region
          _
        $region16: #{tpu_custom_call.1} parent=11 // pred_fallthru
          _
        // Predicated region
        $region17: #{tpu_custom_call.1} parent=11 // pred_check
          %p257 = pneg %p137
        $region18: #{tpu_custom_call.1} parent=11 // pred_check_branch
          %259 = sbr.rel (%p257) target = $region20
        $region19: #{tpu_custom_call.1} parent=11 // pred_region
          _
        $region20: #{tpu_custom_call.1} parent=11 // pred_fallthru
          _
        // Predicated region
        $region21: #{tpu_custom_call.1} parent=11 // pred_check
          %p260 = pneg %p158
        $region22: #{tpu_custom_call.1} parent=11 // pred_check_branch
          %262 = sbr.rel (%p260) target = $region24
        $region23: #{tpu_custom_call.1} parent=11 // pred_region
          _
        $region24: #{tpu_custom_call.1} parent=11 // pred_fallthru
          _
        // Predicated region
        $region25: #{tpu_custom_call.1} parent=11 // pred_check
          %p263 = pneg %p179
        $region26: #{tpu_custom_call.1} parent=11 // pred_check_branch
          %265 = sbr.rel (%p263) target = $region28
        $region27: #{tpu_custom_call.1} parent=11 // pred_region
          _
        $region28: #{tpu_custom_call.1} parent=11 // pred_fallthru
          _
      $region12: #{tpu_custom_call.1} parent=5 // pred_fallthru
        _
      %p266 = scmp.lt.s32.totalorder %s20, 8
      // Predicated region
      $region29: #{tpu_custom_call.1} parent=5 // pred_check
        %p267 = pneg %p266
      $region30: #{tpu_custom_call.1} parent=5 // pred_check_branch
        %269 = sbr.rel (%p267) target = $region32
      $region31: #{tpu_custom_call.1} parent=5 // pred_region
        // Predicated region
        $region33: #{tpu_custom_call.1} parent=31 // pred_check
          %p270 = pneg %p61
        $region34: #{tpu_custom_call.1} parent=31 // pred_check_branch
          %272 = sbr.rel (%p270) target = $region36
        $region35: #{tpu_custom_call.1} parent=31 // pred_region
          %p273 = scmp.lt.s32.totalorder %s27, 1
          %s274 = scalar_select %p273, %s27, 1
          %p275 = scmp.lt.s32.totalorder %s28, 0
          %s276 = scalar_select %p275, %s28, 0
          %s277 = sadd.s32 %s276, %s274
          %s278 = smul.addr %s277, 8
          %s279 = scalar_lea.vmem %s0, %s278
        $region36: #{tpu_custom_call.1} parent=31 // pred_fallthru
          _
        // Predicated region
        $region37: #{tpu_custom_call.1} parent=31 // pred_check
          %p280 = pneg %p89
        $region38: #{tpu_custom_call.1} parent=31 // pred_check_branch
          %282 = sbr.rel (%p280) target = $region40
        $region39: #{tpu_custom_call.1} parent=31 // pred_region
          %p283 = scmp.lt.s32.totalorder %s27, 1
          %s284 = scalar_select %p283, %s27, 1
          %p285 = scmp.lt.s32.totalorder %s28, 0
          %s286 = scalar_select %p285, %s28, 0
          %s287 = sadd.s32 %s286, %s284
          %s288 = smul.addr %s287, 8
          %s289 = scalar_lea.vmem %s1, %s288
        $region40: #{tpu_custom_call.1} parent=31 // pred_fallthru
          _
      $region32: #{tpu_custom_call.1} parent=5 // pred_fallthru
        _
      %p290 = scmp.le.s32.totalorder 1, %s20
      %p291 = scmp.lt.s32.totalorder %s20, 9
      %p292 = pnand %p290, %p291
      %p293 = pneg %p292
      // Predicated region
      $region41: #{tpu_custom_call.1} parent=5 // pred_check
        _
      $region42: #{tpu_custom_call.1} parent=5 // pred_check_branch
        %295 = sbr.rel (%p292) target = $region44
      $region43: #{tpu_custom_call.1} parent=5 // pred_region
        %s296 = ssub.s32 %s20, 1
        %p297 = scmp.lt.s32.totalorder %s30, 1
        %s298 = scalar_select %p297, %s30, 1
        %p299 = scmp.lt.s32.totalorder %s31, 0
        %s300 = scalar_select %p299, %s31, 0
        %s301 = sadd.s32 %s300, %s298
        %s302 = smul.addr %s301, 8
        %s303 = scalar_lea.vmem %s0, %s302
        %p304 = pneg %p67
        %p305 = pneg %p64
        %p306 = scmp.lt.s32.totalorder %s30, 1
        %s307 = scalar_select %p306, %s30, 1
        %p308 = scmp.lt.s32.totalorder %s31, 0
        %s309 = scalar_select %p308, %s31, 0
        %s310 = sadd.s32 %s309, %s307
        %s311 = smul.addr %s310, 8
        %s312 = scalar_lea.vmem %s1, %s311
        %p313 = pneg %p95
        %p314 = pneg %p92
        %p315 = pneg %p116
        %p316 = pneg %p113
        %p317 = pneg %p137
        %p318 = pneg %p134
        %p319 = pneg %p158
        %p320 = pneg %p155
        %p321 = pneg %p179
        %p322 = pneg %p176
        %p323 = pneg %p209
        %p324 = pneg %p206
        %s325 = sand.u32 %s196, 1
        %s326 = scalar_lea.sflag [#allocation3], %s325
        %s327 = sand.u32 %s196, 1
        %s328 = smul.addr %s327, 8
        %s329 = scalar_lea.vmem [#allocation2], %s328
        %p330 = pneg %p239
        %p331 = pneg %p236
        %s332 = sand.u32 %s226, 1
        %s333 = scalar_lea.sflag [#allocation5], %s332
        %s334 = sand.u32 %s226, 1
        %s335 = smul.addr %s334, 8
        %s336 = scalar_lea.vmem [#allocation4], %s335
        %p337 = scmp.lt.s32.totalorder %s30, 1
        %s338 = scalar_select %p337, %s30, 1
        %p339 = scmp.lt.s32.totalorder %s31, 0
        %s340 = scalar_select %p339, %s31, 0
        %s341 = sadd.s32 %s340, %s338
        %s342 = smul.addr %s341, 8
        %s343 = scalar_lea.vmem %s0, %s342
        %p344 = scmp.lt.s32.totalorder %s30, 1
        %s345 = scalar_select %p344, %s30, 1
        %p346 = scmp.lt.s32.totalorder %s31, 0
        %s347 = scalar_select %p346, %s31, 0
        %s348 = sadd.s32 %s347, %s345
        %s349 = smul.addr %s348, 8
        %s350 = scalar_lea.vmem %s1, %s349
        %v351 = vld [vmem:[%s343] sm:$0xff]
        %s352 = smul.u32 %s32, 32
        %s353 = scalar_lea.vmem %s2, %s352
        %v354 = vld [vmem:[%s353] sm:$0xff]
        %v355 = vld [vmem:[%s353 + $0x8] sm:$0xff]
        %v356 = vld [vmem:[%s353 + $0x10] sm:$0xff]
        %v357 = vld [vmem:[%s353 + $0x18] sm:$0xff]
        %s358 = scalar_lea.vmem %s3, %s32
        %v359 = vld [vmem:[%s358] sm:$0x1]
        %v361 = vlaneseq
        %v362 = vshrl.u32 %v361, 7
        %v363 = vsub.s32 0, %v362
        %v364 = vrot.slane %v359, %v363
        %vm366 = vcmask 261120
        %v368 = vsel %vm366, %v351, 0
        %370 = vmatprep.subr.mxu0 0.0
        %371 = vmatpush1.msra.mxu0 %v354
        %372 = vmatprep.subr.mxu0 0.0
        %373 = vmatpush1.msra.mxu0 %v355
        %374 = vmatprep.subr.mxu0 0.0
        %375 = vmatpush1.msra.mxu0 %v356
        %376 = vmatprep.subr.mxu0 0.0
        %377 = vmatpush1.msra.mxu0 %v357
        %378 = vmatprep.subr.mxu0 0.0
        %379 = vmatpush1.msra.mxu0 0.0
        %380 = vmatprep.subr.mxu0 0.0
        %381 = vmatpush1.msra.mxu0 0.0
        %382 = vmatprep.subr.mxu0 0.0
        %383 = vmatpush1.msra.mxu0 0.0
        %384 = vmatprep.subr.mxu0 0.0
        %385 = vmatpush1.msra.mxu0 0.0
        %386 = vmatprep.subr.mxu0 0.0
        %387 = vmatpush1.msra.mxu0 0.0
        %388 = vmatprep.subr.mxu0 0.0
        %389 = vmatpush1.msra.mxu0 0.0
        %390 = vmatprep.subr.mxu0 0.0
        %391 = vmatpush1.msra.mxu0 0.0
        %392 = vmatprep.subr.mxu0 0.0
        %393 = vmatpush1.msra.mxu0 0.0
        %394 = vmatprep.subr.mxu0 0.0
        %395 = vmatpush1.msra.mxu0 0.0
        %396 = vmatprep.subr.mxu0 0.0
        %397 = vmatpush1.msra.mxu0 0.0
        %398 = vmatprep.subr.mxu0 0.0
        %399 = vmatpush1.msra.mxu0 0.0
        %400 = vmatprep.subr.mxu0 0.0
        %401 = vmatpush1.msra.mxu0 0.0
        %402 = vmatprep.subr.mxu0 0.0
        %403 = vmatpush1.msra.mxu0 0.0
        %404 = vmatprep.subr.mxu0 0.0
        %405 = vmatpush1.msra.mxu0 0.0
        %406 = vmatprep.subr.mxu0 0.0
        %407 = vmatpush1.msra.mxu0 0.0
        %408 = vmatprep.subr.mxu0 0.0
        %409 = vmatpush1.msra.mxu0 0.0
        %410 = vmatprep.subr.mxu0 0.0
        %411 = vmatpush1.msra.mxu0 0.0
        %412 = vmatprep.subr.mxu0 0.0
        %413 = vmatpush1.msra.mxu0 0.0
        %414 = vmatprep.subr.mxu0 0.0
        %415 = vmatpush1.msra.mxu0 0.0
        %416 = vmatprep.subr.mxu0 0.0
        %417 = vmatpush1.msra.mxu0 0.0
        %418 = vmatprep.subr.mxu0 0.0
        %419 = vmatpush1.msra.mxu0 0.0
        %420 = vmatprep.subr.mxu0 0.0
        %421 = vmatpush1.msra.mxu0 0.0
        %422 = vmatprep.subr.mxu0 0.0
        %423 = vmatpush1.msra.mxu0 0.0
        %424 = vmatprep.subr.mxu0 0.0
        %425 = vmatpush1.msra.mxu0 0.0
        %426 = vmatprep.subr.mxu0 0.0
        %427 = vmatpush1.msra.mxu0 0.0
        %428 = vmatprep.subr.mxu0 0.0
        %429 = vmatpush1.msra.mxu0 0.0
        %430 = vmatprep.subr.mxu0 0.0
        %431 = vmatpush1.msra.mxu0 0.0
        %432 = vmatprep.subr.mxu0 0.0
        %433 = vmatpush1.msra.mxu0 0.0
        %434 = vmatprep.mubr.f32.mxu0 0.0
        %435 = vmatmul.mubr.f32.gmra.mrb[0].mxu0 %v368
        %v436 = vpop.f32.mrb[0].mxu0
        %v437 = vadd.f32 %v364, %v436
        %v438 = vpop.f32.mrb[0].mxu0
        %439 = vdwg.mxu0
        %vm440 = vcmask 64512
        %441 = vst.msk [vmem:[%s329] sm:$0xff] %vm440, %v437
        %v442 = vld [vmem:[%s350] sm:$0xff]
        %s443 = scalar_lea.vmem %s4, %s352
        %v444 = vld [vmem:[%s443] sm:$0xff]
        %v445 = vld [vmem:[%s443 + $0x8] sm:$0xff]
        %v446 = vld [vmem:[%s443 + $0x10] sm:$0xff]
        %v447 = vld [vmem:[%s443 + $0x18] sm:$0xff]
        %s448 = scalar_lea.vmem %s5, %s32
        %v449 = vld [vmem:[%s448] sm:$0x1]
        %v451 = vlaneseq
        %v452 = vshrl.u32 %v451, 7
        %v453 = vsub.s32 0, %v452
        %v454 = vrot.slane %v449, %v453
        %v457 = vsel %vm366, %v442, 0
        %459 = vmatprep.subr.mxu0 0.0
        %460 = vmatpush1.msra.mxu0 %v444
        %461 = vmatprep.subr.mxu0 0.0
        %462 = vmatpush1.msra.mxu0 %v445
        %463 = vmatprep.subr.mxu0 0.0
        %464 = vmatpush1.msra.mxu0 %v446
        %465 = vmatprep.subr.mxu0 0.0
        %466 = vmatpush1.msra.mxu0 %v447
        %467 = vmatprep.subr.mxu0 0.0
        %468 = vmatpush1.msra.mxu0 0.0
        %469 = vmatprep.subr.mxu0 0.0
        %470 = vmatpush1.msra.mxu0 0.0
        %471 = vmatprep.subr.mxu0 0.0
        %472 = vmatpush1.msra.mxu0 0.0
        %473 = vmatprep.subr.mxu0 0.0
        %474 = vmatpush1.msra.mxu0 0.0
        %475 = vmatprep.subr.mxu0 0.0
        %476 = vmatpush1.msra.mxu0 0.0
        %477 = vmatprep.subr.mxu0 0.0
        %478 = vmatpush1.msra.mxu0 0.0
        %479 = vmatprep.subr.mxu0 0.0
        %480 = vmatpush1.msra.mxu0 0.0
        %481 = vmatprep.subr.mxu0 0.0
        %482 = vmatpush1.msra.mxu0 0.0
        %483 = vmatprep.subr.mxu0 0.0
        %484 = vmatpush1.msra.mxu0 0.0
        %485 = vmatprep.subr.mxu0 0.0
        %486 = vmatpush1.msra.mxu0 0.0
        %487 = vmatprep.subr.mxu0 0.0
        %488 = vmatpush1.msra.mxu0 0.0
        %489 = vmatprep.subr.mxu0 0.0
        %490 = vmatpush1.msra.mxu0 0.0
        %491 = vmatprep.subr.mxu0 0.0
        %492 = vmatpush1.msra.mxu0 0.0
        %493 = vmatprep.subr.mxu0 0.0
        %494 = vmatpush1.msra.mxu0 0.0
        %495 = vmatprep.subr.mxu0 0.0
        %496 = vmatpush1.msra.mxu0 0.0
        %497 = vmatprep.subr.mxu0 0.0
        %498 = vmatpush1.msra.mxu0 0.0
        %499 = vmatprep.subr.mxu0 0.0
        %500 = vmatpush1.msra.mxu0 0.0
        %501 = vmatprep.subr.mxu0 0.0
        %502 = vmatpush1.msra.mxu0 0.0
        %503 = vmatprep.subr.mxu0 0.0
        %504 = vmatpush1.msra.mxu0 0.0
        %505 = vmatprep.subr.mxu0 0.0
        %506 = vmatpush1.msra.mxu0 0.0
        %507 = vmatprep.subr.mxu0 0.0
        %508 = vmatpush1.msra.mxu0 0.0
        %509 = vmatprep.subr.mxu0 0.0
        %510 = vmatpush1.msra.mxu0 0.0
        %511 = vmatprep.subr.mxu0 0.0
        %512 = vmatpush1.msra.mxu0 0.0
        %513 = vmatprep.subr.mxu0 0.0
        %514 = vmatpush1.msra.mxu0 0.0
        %515 = vmatprep.subr.mxu0 0.0
        %516 = vmatpush1.msra.mxu0 0.0
        %517 = vmatprep.subr.mxu0 0.0
        %518 = vmatpush1.msra.mxu0 0.0
        %519 = vmatprep.subr.mxu0 0.0
        %520 = vmatpush1.msra.mxu0 0.0
        %521 = vmatprep.subr.mxu0 0.0
        %522 = vmatpush1.msra.mxu0 0.0
        %523 = vmatprep.mubr.f32.mxu0 0.0
        %524 = vmatmul.mubr.f32.gmra.mrb[0].mxu0 %v457
        %v525 = vpop.f32.mrb[0].mxu0
        %v526 = vadd.f32 %v454, %v525
        %v527 = vpop.f32.mrb[0].mxu0
        %528 = vdwg.mxu0
        %529 = vst.msk [vmem:[%s336] sm:$0xff] %vm440, %v526
        %s530 = sand.u32 %s196, 1
        %s531 = scalar_lea.sflag [#allocation3], %s530
        %s532 = sand.u32 %s196, 1
        %s533 = smul.addr %s532, 8
        %s534 = scalar_lea.vmem [#allocation2], %s533
        %s535 = sand.u32 %s226, 1
        %s536 = scalar_lea.sflag [#allocation5], %s535
        %s537 = sand.u32 %s226, 1
        %s538 = smul.addr %s537, 8
        %s539 = scalar_lea.vmem [#allocation4], %s538
        // Predicated region
        $region45: #{tpu_custom_call.1} parent=43 // pred_check
          %p540 = pneg %p206
        $region46: #{tpu_custom_call.1} parent=43 // pred_check_branch
          %542 = sbr.rel (%p540) target = $region48
        $region47: #{tpu_custom_call.1} parent=43 // pred_region
          %s544 = ssub.s32 128, 128
          %545 = vsyncadd %s531, %s544
          %s546 = sadd.s32 %s31, %s32
          %s547 = smul.addr %s30, 4
          %s548 = sadd.s32 %s546, %s547
          %s549 = smul.addr %s548, 128
          %s550 = scalar_lea.hbm %s6, %s549
          %s552 = sshll.u32 %s534, 4
          %s553 = int_to_ptr.vmem [resolvable:$true] %s552
          %555 = dma.vmem_to_hbm [thread:$0]  %s553, 128, %s550, %s531
        $region48: #{tpu_custom_call.1} parent=43 // pred_fallthru
          _
        // Predicated region
        $region49: #{tpu_custom_call.1} parent=43 // pred_check
          %p556 = pneg %p236
        $region50: #{tpu_custom_call.1} parent=43 // pred_check_branch
          %558 = sbr.rel (%p556) target = $region52
        $region51: #{tpu_custom_call.1} parent=43 // pred_region
          %s560 = ssub.s32 128, 128
          %561 = vsyncadd %s536, %s560
          %s562 = sadd.s32 %s31, %s32
          %s563 = smul.addr %s30, 4
          %s564 = sadd.s32 %s562, %s563
          %s565 = smul.addr %s564, 128
          %s566 = scalar_lea.hbm %s7, %s565
          %s568 = sshll.u32 %s539, 4
          %s569 = int_to_ptr.vmem [resolvable:$true] %s568
          %571 = dma.vmem_to_hbm [thread:$0]  %s569, 128, %s566, %s536
        $region52: #{tpu_custom_call.1} parent=43 // pred_fallthru
          _
      $region44: #{tpu_custom_call.1} parent=5 // pred_fallthru
        _
      %p572 = scmp.le.s32.totalorder 2, %s20
      // Predicated region
      $region53: #{tpu_custom_call.1} parent=5 // pred_check
        %p573 = pneg %p572
      $region54: #{tpu_custom_call.1} parent=5 // pred_check_branch
        %575 = sbr.rel (%p573) target = $region56
      $region55: #{tpu_custom_call.1} parent=5 // pred_region
        %s576 = ssub.s32 %s20, 2
        // Predicated region
        $region57: #{tpu_custom_call.1} parent=55 // pred_check
          %p577 = pneg %p212
        $region58: #{tpu_custom_call.1} parent=55 // pred_check_branch
          %579 = sbr.rel (%p577) target = $region60
        $region59: #{tpu_custom_call.1} parent=55 // pred_region
          %s580 = sand.u32 %s197, 1
          %s581 = scalar_lea.sflag [#allocation3], %s580
          %s582 = sand.u32 %s197, 1
          %s583 = smul.addr %s582, 8
          %s584 = scalar_lea.vmem [#allocation2], %s583
          %585 = dma.done %s581, 128
        $region60: #{tpu_custom_call.1} parent=55 // pred_fallthru
          _
        // Predicated region
        $region61: #{tpu_custom_call.1} parent=55 // pred_check
          %p586 = pneg %p242
        $region62: #{tpu_custom_call.1} parent=55 // pred_check_branch
          %588 = sbr.rel (%p586) target = $region64
        $region63: #{tpu_custom_call.1} parent=55 // pred_region
          %s589 = sand.u32 %s227, 1
          %s590 = scalar_lea.sflag [#allocation5], %s589
          %s591 = sand.u32 %s227, 1
          %s592 = smul.addr %s591, 8
          %s593 = scalar_lea.vmem [#allocation4], %s592
          %594 = dma.done %s590, 128
        $region64: #{tpu_custom_call.1} parent=55 // pred_fallthru
          _
      $region56: #{tpu_custom_call.1} parent=5 // pred_fallthru
        _
    $region6: #{tpu_custom_call.1} parent=1 // loop_footer
      %s24 = sadd.s32 1, %s20
    $region7: #{tpu_custom_call.1} parent=1 // loop_footer_branch
      %19 = sbr.rel target = $region3
    $region8: #{tpu_custom_call.1} parent=1 // loop_exit
      _
    %595 = vsyncpa [#allocation3], 1
    %s596 = scalar_lea.sflag [#allocation3], 1
    %597 = vsyncpa %s596, 1
    %598 = vsyncpa [#allocation5], 1
    %s599 = scalar_lea.sflag [#allocation5], 1
    %600 = vsyncpa %s599, 1

</llo_original>
